<compile_context>
chip_gen: v7x
topology: tpu7x:2x2x1
jax: 0.10.0
libtpu: 0.0.40
codegen_flags: <defaults>
</compile_context>

<pallas_src>
import jax
import jax.numpy as jnp
from jax.experimental import pallas as pl
from jax.experimental.pallas import tpu as pltpu


_PACK = 8  # logical rows packed per lane-dense physical row (one sublane group)


def _ar_kernel(x_ref, w_ref, b_ref, o_ref):
    # x_ref: (TM, PACK*window) VMEM  -- lane-dense packed input rows
    # w_ref: (PACK*window, PACK) VMEM -- block-diagonal packed weight
    # b_ref: (1,) SMEM                -- scalar bias
    # o_ref: (TM, PACK) VMEM          -- o[r, j] = <x_row[PACK*r + j], w> + b
    acc = jnp.dot(x_ref[...], w_ref[...], preferred_element_type=jnp.float32)
    o_ref[...] = (acc + b_ref[0]).astype(o_ref.dtype)


def _round_up(a, b):
    return ((a + b - 1) // b) * b


def ar_forward(x, weight, bias, *, max_block_rows=8192):
    """Applies y = x @ weight.T + bias where weight: (1, window), bias: (1,).

    x: (..., window) float32 -> returns (..., 1) float32.
    """
    window = x.shape[-1]
    lead = x.shape[:-1]
    m = 1
    for d in lead:
        m *= d

    x2d = x.reshape(m, window).astype(jnp.float32)

    # ---- lane-dense packing: PACK logical rows -> one physical row ----------
    pw = _PACK * window                       # 128 lanes for window=16
    m_pad = _round_up(m, _PACK)
    if m_pad != m:
        x2d = jnp.pad(x2d, ((0, m_pad - m), (0, 0)))
    rows = m_pad // _PACK
    xp = x2d.reshape(rows, pw)                # contiguous row-major reshape (free)

    # ---- tile rows over the grid; pad so the grid divides evenly ------------
    tm = min(max_block_rows, _round_up(rows, _PACK))   # ~4 MiB x tile at max
    rows_pad = _round_up(rows, tm)
    if rows_pad != rows:
        xp = jnp.pad(xp, ((0, rows_pad - rows), (0, 0)))

    # ---- block-diagonal packed weight: wp[j*window + k, j] = w[k] -----------
    w = weight.reshape(window).astype(jnp.float32)
    wp = jnp.kron(jnp.eye(_PACK, dtype=jnp.float32), w[:, None])   # (pw, PACK)

    b = bias.reshape(1).astype(jnp.float32)

    grid = (rows_pad // tm,)
    out = pl.pallas_call(
        _ar_kernel,
        out_shape=jax.ShapeDtypeStruct((rows_pad, _PACK), jnp.float32),
        grid_spec=pltpu.PrefetchScalarGridSpec(
            num_scalar_prefetch=0,
            grid=grid,
            in_specs=[
                pl.BlockSpec((tm, pw), lambda i: (i, 0)),       # x tile (pipelined)
                pl.BlockSpec((pw, _PACK), lambda i: (0, 0)),    # packed weight (resident)
                pl.BlockSpec(memory_space=pltpu.MemorySpace.SMEM),  # scalar bias
            ],
            out_specs=pl.BlockSpec((tm, _PACK), lambda i: (i, 0)),
        ),
        compiler_params=pltpu.CompilerParams(
            dimension_semantics=("parallel",),   # shard row tiles across TCs (v7x)
        ),
    )(xp, wp, b)

    # out[r, j] corresponds to logical row PACK*r + j -> row-major flatten.
    y = out.reshape(-1)[:m]
    return y.reshape(*lead, 1)


if __name__ == "__main__":
    # Small shapes consistent with the module: x of shape (batch, channels, seq, window)
    batch, channels, seq, window = 2, 4, 16, 16

    key = jax.random.PRNGKey(0)
    kx, kw, kb = jax.random.split(key, 3)

    x = jax.random.normal(kx, (batch, channels, seq, window), dtype=jnp.float32)

    # Deterministic init matching nn.Linear default: U(-1/sqrt(window), 1/sqrt(window))
    bound = 1.0 / (window ** 0.5)
    weight = jax.random.uniform(kw, (1, window), minval=-bound, maxval=bound,
                                dtype=jnp.float32)
    bias = jax.random.uniform(kb, (1,), minval=-bound, maxval=bound,
                              dtype=jnp.float32)

    y = ar_forward(x, weight, bias)
    y = jax.block_until_ready(y)

    # Pure-JAX reference check of the linear layer.
    y_ref = x @ weight.T + bias
    assert y.shape == (batch, channels, seq, 1), y.shape
    assert jnp.allclose(y, y_ref, atol=1e-5, rtol=1e-5), "mismatch vs reference"

    print("KERNEL_OK")
</pallas_src>

<mosaic_0001>
module attributes {stable_mosaic.version = 11 : i64} {
  func.func @_ar_kernel(%arg0: i32, %arg1: memref<16x128xf32, #tpu.memory_space<vmem>>, %arg2: memref<128x8xf32, #tpu.memory_space<vmem>>, %arg3: memref<1xf32, #tpu.memory_space<smem>>, %arg4: memref<16x8xf32, #tpu.memory_space<vmem>>) attributes {dimension_semantics = [#tpu.dimension_semantics<parallel>], iteration_bounds = array<i64: 1>, scalar_prefetch = 0 : i64, scratch_operands = 0 : i64, tpu.core_type = #tpu.core_type<tc>, window_params = [{transform_indices = @transform_0, window_bounds = array<i64: 16, 128>}, {pipeline_mode = #tpu.pipeline_mode<synchronous>, transform_indices = @transform_1, window_bounds = array<i64: 128, 8>}, {transform_indices = @transform_2, window_bounds = array<i64: 1>}, {transform_indices = @transform_3, window_bounds = array<i64: 16, 8>}]} {
    %c0 = arith.constant 0 : index
    %c0_0 = arith.constant 0 : index
    %0 = vector.load %arg1[%c0, %c0_0] : memref<16x128xf32, #tpu.memory_space<vmem>>, vector<16x128xf32>
    %c0_1 = arith.constant 0 : index
    %c0_2 = arith.constant 0 : index
    %1 = vector.load %arg2[%c0_1, %c0_2] : memref<128x8xf32, #tpu.memory_space<vmem>>, vector<128x8xf32>
    %cst = arith.constant dense<0.000000e+00> : vector<16x8xf32>
    %2 = tpu.matmul %0, %1, %cst {dimension_numbers = #tpu.dot_dimension_numbers<[1], [0], [0], [1], [0, 0, 1, 1], [], []>} : vector<16x128xf32>, vector<128x8xf32>, vector<16x8xf32> -> vector<16x8xf32>
    %c0_3 = arith.constant 0 : index
    %3 = memref.load %arg3[%c0_3] : memref<1xf32, #tpu.memory_space<smem>>
    %4 = vector.broadcast %3 : f32 to vector<16x8xf32>
    %5 = arith.addf %2, %4 : vector<16x8xf32>
    %c0_4 = arith.constant 0 : index
    %c0_5 = arith.constant 0 : index
    %6 = vector.load %arg4[%c0_4, %c0_5] : memref<16x8xf32, #tpu.memory_space<vmem>>, vector<16x8xf32>
    tpu.vector_store %arg4[%c0_4, %c0_5], %5 {strides = array<i32>} : memref<16x8xf32, #tpu.memory_space<vmem>>, vector<16x8xf32>,
    return
  }
  func.func @transform_0(%arg0: i32) -> (i32, i32) {
    %c0_i32 = arith.constant 0 : i32
    %c0_i32_0 = arith.constant 0 : i32
    return %arg0, %c0_i32 : i32, i32
  }
  func.func @transform_1(%arg0: i32) -> (i32, i32) {
    %c0_i32 = arith.constant 0 : i32
    %c0_i32_0 = arith.constant 0 : i32
    %c0_i32_1 = arith.constant 0 : i32
    return %c0_i32, %c0_i32_0 : i32, i32
  }
  func.func @transform_2(%arg0: i32) -> i32 {
    %c0_i32 = arith.constant 0 : i32
    %c0_i32_0 = arith.constant 0 : i32
    return %c0_i32 : i32
  }
  func.func @transform_3(%arg0: i32) -> (i32, i32) {
    %c0_i32 = arith.constant 0 : i32
    %c0_i32_0 = arith.constant 0 : i32
    return %arg0, %c0_i32 : i32, i32
  }
}

</mosaic_0001>

<llo_original>
// kernel: tpu_custom_call.1
$region0: #{tpu_custom_call.1}
  #allocation0 [shape = 'u32[]', space=smem, size = 0x4, offset = 0x4, fixed_abs, tag = 'smem constant byte address 0x4 - core index']
  #allocation1 [shape = 'u32[144,128]{1,0:T(1,128)}', space=vmem, size = 0x12000, scoped, tag = 'internal scratch']
  #allocation2 [shape = 'f32[1]{0:T(128)S(6)}', space=smem, size = 0x200, scoped, tag = 'scoped memory for tpu_custom_call.1']
  %s0 = inlined_call_operand.vmem [shape: f32[16,128], index: 0, kind: input, shape index: {}]
  %s1 = inlined_call_operand.vmem [shape: f32[128,8], index: 1, kind: input, shape index: {}]
  %s2 = inlined_call_operand.<no memory space> [shape: f32[1], index: 2, kind: input, shape index: {}]
  %s3 = inlined_call_operand.vmem [shape: f32[16,8], index: 3, kind: output, shape index: {}]
  %s4 = sld [smem:[#allocation0]]
  $region22: #{tpu_custom_call.1} parent=0
    _
  %s6 = ssub.s32 1, %s4
  %s7 = scalar_select 0, %s6, %s4
  %8 = sst [smem:[#allocation2]] %s2
  // Predicated region
  $region2: #{tpu_custom_call.1} parent=0 // pred_check
    _
  $region3: #{tpu_custom_call.1} parent=0 // pred_check_branch
    %10 = sbr.rel (0) target = $region5
  $region4: #{tpu_custom_call.1} parent=0 // pred_region
    _
  $region5: #{tpu_custom_call.1} parent=0 // pred_fallthru
    _
  // Predicated region
  $region6: #{tpu_custom_call.1} parent=0 // pred_check
    _
  $region7: #{tpu_custom_call.1} parent=0 // pred_check_branch
    %12 = sbr.rel (0) target = $region9
  $region8: #{tpu_custom_call.1} parent=0 // pred_region
    _
  $region9: #{tpu_custom_call.1} parent=0 // pred_fallthru
    _
  // Predicated region
  $region10: #{tpu_custom_call.1} parent=0 // pred_check
    _
  $region11: #{tpu_custom_call.1} parent=0 // pred_check_branch
    %14 = sbr.rel (0) target = $region13
  $region12: #{tpu_custom_call.1} parent=0 // pred_region
    _
  $region13: #{tpu_custom_call.1} parent=0 // pred_fallthru
    _
  %v15 = vld [vmem:[%s0] sm:$0xff]
  %v16 = vld [vmem:[%s0 + $0x8] sm:$0xff]
  %v17 = vld [vmem:[%s1] sm:$0xff]
  %v18 = vld [vmem:[%s1 + $0x8] sm:$0xff]
  %v19 = vld [vmem:[%s1 + $0x10] sm:$0xff]
  %v20 = vld [vmem:[%s1 + $0x18] sm:$0xff]
  %v21 = vld [vmem:[%s1 + $0x20] sm:$0xff]
  %v22 = vld [vmem:[%s1 + $0x28] sm:$0xff]
  %v23 = vld [vmem:[%s1 + $0x30] sm:$0xff]
  %v24 = vld [vmem:[%s1 + $0x38] sm:$0xff]
  %v25 = vld [vmem:[%s1 + $0x40] sm:$0xff]
  %v26 = vld [vmem:[%s1 + $0x48] sm:$0xff]
  %v27 = vld [vmem:[%s1 + $0x50] sm:$0xff]
  %v28 = vld [vmem:[%s1 + $0x58] sm:$0xff]
  %v29 = vld [vmem:[%s1 + $0x60] sm:$0xff]
  %v30 = vld [vmem:[%s1 + $0x68] sm:$0xff]
  %v31 = vld [vmem:[%s1 + $0x70] sm:$0xff]
  %v32 = vld [vmem:[%s1 + $0x78] sm:$0xff]
  %s33 = sld [smem:[#allocation2]]
  %v34 = vstv %s33
  %35 = vmatprep.subr.mxu0 0.0
  %36 = vmatpush1.msra.mxu0 %v17
  %37 = vmatprep.subr.mxu0 0.0
  %38 = vmatpush1.msra.mxu0 %v18
  %39 = vmatprep.subr.mxu0 0.0
  %40 = vmatpush1.msra.mxu0 %v19
  %41 = vmatprep.subr.mxu0 0.0
  %42 = vmatpush1.msra.mxu0 %v20
  %43 = vmatprep.subr.mxu0 0.0
  %44 = vmatpush1.msra.mxu0 %v21
  %45 = vmatprep.subr.mxu0 0.0
  %46 = vmatpush1.msra.mxu0 %v22
  %47 = vmatprep.subr.mxu0 0.0
  %48 = vmatpush1.msra.mxu0 %v23
  %49 = vmatprep.subr.mxu0 0.0
  %50 = vmatpush1.msra.mxu0 %v24
  %51 = vmatprep.subr.mxu0 0.0
  %52 = vmatpush1.msra.mxu0 %v25
  %53 = vmatprep.subr.mxu0 0.0
  %54 = vmatpush1.msra.mxu0 %v26
  %55 = vmatprep.subr.mxu0 0.0
  %56 = vmatpush1.msra.mxu0 %v27
  %57 = vmatprep.subr.mxu0 0.0
  %58 = vmatpush1.msra.mxu0 %v28
  %59 = vmatprep.subr.mxu0 0.0
  %60 = vmatpush1.msra.mxu0 %v29
  %61 = vmatprep.subr.mxu0 0.0
  %62 = vmatpush1.msra.mxu0 %v30
  %63 = vmatprep.subr.mxu0 0.0
  %64 = vmatpush1.msra.mxu0 %v31
  %65 = vmatprep.subr.mxu0 0.0
  %66 = vmatpush1.msra.mxu0 %v32
  %67 = vmatprep.subr.mxu0 0.0
  %68 = vmatpush1.msra.mxu0 0.0
  %69 = vmatprep.subr.mxu0 0.0
  %70 = vmatpush1.msra.mxu0 0.0
  %71 = vmatprep.subr.mxu0 0.0
  %72 = vmatpush1.msra.mxu0 0.0
  %73 = vmatprep.subr.mxu0 0.0
  %74 = vmatpush1.msra.mxu0 0.0
  %75 = vmatprep.subr.mxu0 0.0
  %76 = vmatpush1.msra.mxu0 0.0
  %77 = vmatprep.subr.mxu0 0.0
  %78 = vmatpush1.msra.mxu0 0.0
  %79 = vmatprep.subr.mxu0 0.0
  %80 = vmatpush1.msra.mxu0 0.0
  %81 = vmatprep.subr.mxu0 0.0
  %82 = vmatpush1.msra.mxu0 0.0
  %83 = vmatprep.subr.mxu0 0.0
  %84 = vmatpush1.msra.mxu0 0.0
  %85 = vmatprep.subr.mxu0 0.0
  %86 = vmatpush1.msra.mxu0 0.0
  %87 = vmatprep.subr.mxu0 0.0
  %88 = vmatpush1.msra.mxu0 0.0
  %89 = vmatprep.subr.mxu0 0.0
  %90 = vmatpush1.msra.mxu0 0.0
  %91 = vmatprep.subr.mxu0 0.0
  %92 = vmatpush1.msra.mxu0 0.0
  %93 = vmatprep.subr.mxu0 0.0
  %94 = vmatpush1.msra.mxu0 0.0
  %95 = vmatprep.subr.mxu0 0.0
  %96 = vmatpush1.msra.mxu0 0.0
  %97 = vmatprep.subr.mxu0 0.0
  %98 = vmatpush1.msra.mxu0 0.0
  %99 = vmatprep.mubr.f32.mxu0 0.0
  %100 = vmatmul.mubr.f32.gmra.mrb[0].mxu0 %v15
  %v101 = vpop.f32.mrb[0].mxu0
  %v102 = vadd.f32 %v34, %v101
  %v103 = vpop.f32.mrb[0].mxu0
  %104 = vmatprep.mubr.f32.mxu0 0.0
  %105 = vmatmul.mubr.f32.gmra.mrb[0].mxu0 %v16
  %v106 = vpop.f32.mrb[0].mxu0
  %v107 = vadd.f32 %v34, %v106
  %v108 = vpop.f32.mrb[0].mxu0
  %109 = vdwg.mxu0
  %vm110 = vcmask 64512
  %111 = vst.msk [vmem:[%s3] sm:$0xff] %vm110, %v102
  %112 = vst.msk [vmem:[%s3 + $0x8] sm:$0xff] %vm110, %v107
  // Predicated region
  $region14: #{tpu_custom_call.1} parent=0 // pred_check
    _
  $region15: #{tpu_custom_call.1} parent=0 // pred_check_branch
    %114 = sbr.rel (0) target = $region17
  $region16: #{tpu_custom_call.1} parent=0 // pred_region
    _
  $region17: #{tpu_custom_call.1} parent=0 // pred_fallthru
    _
  // Predicated region
  $region18: #{tpu_custom_call.1} parent=0 // pred_check
    _
  $region19: #{tpu_custom_call.1} parent=0 // pred_check_branch
    %116 = sbr.rel (0) target = $region21
  $region20: #{tpu_custom_call.1} parent=0 // pred_region
    _
  $region21: #{tpu_custom_call.1} parent=0 // pred_fallthru
    _

</llo_original>
